<compile_context>
chip_gen: v7x
topology: tpu7x:2x2x1
jax: 0.10.0
libtpu: 0.0.40
codegen_flags: <defaults>
</compile_context>

<pallas_src>
import math

import jax
import jax.numpy as jnp
from jax.experimental import pallas as pl
from jax.experimental.pallas import tpu as pltpu


def _cdiv(a, b):
    return -(-a // b)


def _pick_lane_width(total, max_lane=4096):
    """Largest multiple of 128 (<= max_lane) that divides `total`, else 0."""
    for lane in range(max_lane, 0, -128):
        if total % lane == 0:
            return lane
    return 0


def _default_tile_bytes():
    """Generation-aware tile size for an HBM-bound elementwise op.

    v7x (3.2 TB/s HBM, 64 MiB VMEM): 8 MiB tiles -> per-step overhead <10%.
    v6e (1.4 TB/s): 6 MiB.  v5e (16 MiB scoped VMEM default): 3 MiB.
    Unknown device kind: a safe 4 MiB.
    """
    try:
        kind = jax.devices()[0].device_kind.lower()
    except Exception:
        kind = ""
    if "v7" in kind or "7x" in kind:
        return 8 * 1024 * 1024
    if "v6" in kind:
        return 6 * 1024 * 1024
    if "v5" in kind:
        return 3 * 1024 * 1024
    return 4 * 1024 * 1024


def _scale_kernel(scale_ref, x_ref, o_ref):
    # scale_ref: (1,) f32 scalar in SMEM.  Cast the *scalar* to the tile dtype
    # so bf16 tiles are multiplied in bf16 (v6e/v7x bf16 VALU) instead of
    # promoting the whole tile to f32 (2x vreg pressure + extra casts).
    o_ref[...] = x_ref[...] * scale_ref[0].astype(o_ref.dtype)


def scale_forward(x, scale, *, target_tile_bytes=None,
                  min_pallas_bytes=1 << 20, donate=False):
    """out = x * scale, with scale a (1,) learnable scalar.  Any-rank input."""
    orig_shape = x.shape
    total = math.prod(orig_shape)
    itemsize = jnp.dtype(x.dtype).itemsize
    scale = jnp.asarray(scale, jnp.float32).reshape(1)

    lane = _pick_lane_width(total)
    # Fallbacks (both avoid extra full-tensor HBM passes):
    #  * tiny tensors: launch + reshape plumbing dominates and XLA's fused
    #    scalar multiply is already at roofline (FCOS head maps are ~KBs);
    #  * totals not divisible by 128: a lane-dense reshape would need a
    #    jnp.pad plus an output slice -- up to two extra full read+write
    #    passes over HBM, which dwarfs anything the kernel could save.
    if total * itemsize < min_pallas_bytes or lane == 0:
        return x * scale[0].astype(x.dtype)

    rows = total // lane
    bytes_per_row = lane * itemsize
    # Sublane packing multiple for the 2nd-minor block dim: f32->8, bf16->16.
    sublane = 8 * max(1, 4 // itemsize)

    if target_tile_bytes is None:
        target_tile_bytes = _default_tile_bytes()

    if rows <= sublane:
        tile_rows = rows                       # single full-extent block (legal)
    else:
        tile_rows = max(sublane,
                        (target_tile_bytes // bytes_per_row) // sublane * sublane)
        # Guarantee >=2 grid steps so both v7x TensorCores get work
        # (costs nothing on single-TC v5e/v6e).
        half_rows = _cdiv(_cdiv(rows, 2), sublane) * sublane
        tile_rows = min(tile_rows, half_rows)

    grid = (_cdiv(rows, tile_rows),)           # partial last block masked by Pallas

    tile_bytes = tile_rows * bytes_per_row
    # 2x double-buffered (input + output) tiles plus headroom; raises the
    # 16/32 MiB scoped defaults where needed, stays under v7x's 64 MiB VMEM.
    vmem_limit = min(56 * 1024 * 1024,
                     max(32 * 1024 * 1024, 4 * tile_bytes + 8 * 1024 * 1024))

    x2d = x.reshape(rows, lane)                # metadata-only for contiguous x

    out2d = pl.pallas_call(
        _scale_kernel,
        out_shape=jax.ShapeDtypeStruct((rows, lane), x.dtype),
        grid_spec=pltpu.PrefetchScalarGridSpec(
            num_scalar_prefetch=0,
            grid=grid,
            in_specs=[
                # scalar parameter in SMEM: no tiling, no per-step DMA
                pl.BlockSpec(memory_space=pltpu.SMEM),
                # lane-dense input tile
                pl.BlockSpec((tile_rows, lane), lambda i: (i, 0)),
            ],
            out_specs=pl.BlockSpec((tile_rows, lane), lambda i: (i, 0)),
        ),
        compiler_params=pltpu.CompilerParams(
            dimension_semantics=("parallel",),
            vmem_limit_bytes=vmem_limit,
        ),
        # Optionally donate x into the output: same bytes moved, but no second
        # full-size HBM allocation (only when the caller no longer needs x).
        input_output_aliases=({1: 0} if donate else {}),
    )(scale, x2d)

    return out2d.reshape(orig_shape)


if __name__ == "__main__":
    key = jax.random.PRNGKey(0)

    # Scale(init_value=1.0) parameter, scaled to 1.5 so the multiply is visible.
    init_value = 1.0
    scale_param = jnp.array([init_value], dtype=jnp.float32) * 1.5

    # 1) Canonical small FCOS-head feature map: default path takes the
    #    small-input fallback (plain fused multiply) ...
    x_small = jax.random.normal(key, (2, 4, 16, 16), dtype=jnp.float32)
    out_small = jax.block_until_ready(scale_forward(x_small, scale_param))
    assert out_small.shape == x_small.shape and out_small.dtype == x_small.dtype
    assert jnp.allclose(out_small, x_small * 1.5, atol=1e-6, rtol=1e-6)

    #    ... and forced through the Pallas kernel to verify it at this size.
    out_small_k = jax.block_until_ready(
        scale_forward(x_small, scale_param, min_pallas_bytes=0))
    assert jnp.allclose(out_small_k, x_small * 1.5, atol=1e-6, rtol=1e-6)

    # 2) Larger f32 tensor: multi-step grid with a partial last block.
    x_med = jax.random.normal(jax.random.PRNGKey(1), (3, 4, 100, 256),
                              dtype=jnp.float32)
    ref_med = x_med * 1.5
    out_med = jax.block_until_ready(scale_forward(x_med, scale_param))
    assert out_med.shape == x_med.shape and out_med.dtype == x_med.dtype
    assert jnp.allclose(out_med, ref_med, atol=1e-6, rtol=1e-6)

    # 2b) Same tensor, donated into the output (ref computed above).
    out_med_d = jax.block_until_ready(
        scale_forward(x_med, scale_param, donate=True))
    assert jnp.allclose(out_med_d, ref_med, atol=1e-6, rtol=1e-6)

    # 3) bf16 input: multiply stays in bf16 inside the kernel.
    x_bf16 = jax.random.normal(jax.random.PRNGKey(2),
                               (2, 8, 64, 128)).astype(jnp.bfloat16)
    out_bf16 = jax.block_until_ready(
        scale_forward(x_bf16, scale_param, min_pallas_bytes=0))
    ref_bf16 = (x_bf16.astype(jnp.float32) * 1.5)
    assert out_bf16.dtype == jnp.bfloat16
    assert jnp.allclose(out_bf16.astype(jnp.float32), ref_bf16,
                        atol=2e-2, rtol=2e-2)

    # 4) Ragged shape (total not a multiple of 128): no pad/slice, fused fallback.
    x_rag = jax.random.normal(jax.random.PRNGKey(3), (2, 3, 17, 13),
                              dtype=jnp.float32)
    out_rag = jax.block_until_ready(scale_forward(x_rag, scale_param))
    assert out_rag.shape == x_rag.shape
    assert jnp.allclose(out_rag, x_rag * 1.5, atol=1e-6, rtol=1e-6)

    print("KERNEL_OK")
</pallas_src>

<mosaic_0001>
module attributes {stable_mosaic.version = 11 : i64} {
  func.func @_scale_kernel(%arg0: i32, %arg1: memref<1xf32, #tpu.memory_space<smem>>, %arg2: memref<1x2048xf32, #tpu.memory_space<vmem>>, %arg3: memref<1x2048xf32, #tpu.memory_space<vmem>>) attributes {dimension_semantics = [#tpu.dimension_semantics<parallel>], iteration_bounds = array<i64: 1>, scalar_prefetch = 0 : i64, scratch_operands = 0 : i64, tpu.core_type = #tpu.core_type<tc>, window_params = [{transform_indices = @transform_0, window_bounds = array<i64: 1>}, {transform_indices = @transform_1, window_bounds = array<i64: 1, 2048>}, {transform_indices = @transform_2, window_bounds = array<i64: 1, 2048>}]} {
    %c0 = arith.constant 0 : index
    %c0_0 = arith.constant 0 : index
    %0 = vector.load %arg2[%c0, %c0_0] : memref<1x2048xf32, #tpu.memory_space<vmem>>, vector<1x2048xf32>
    %c0_1 = arith.constant 0 : index
    %1 = memref.load %arg1[%c0_1] : memref<1xf32, #tpu.memory_space<smem>>
    %2 = vector.broadcast %1 : f32 to vector<1x2048xf32>
    %3 = arith.mulf %0, %2 : vector<1x2048xf32>
    %c0_2 = arith.constant 0 : index
    %c0_3 = arith.constant 0 : index
    %4 = vector.load %arg3[%c0_2, %c0_3] : memref<1x2048xf32, #tpu.memory_space<vmem>>, vector<1x2048xf32>
    tpu.vector_store %arg3[%c0_2, %c0_3], %3 {strides = array<i32>} : memref<1x2048xf32, #tpu.memory_space<vmem>>, vector<1x2048xf32>,
    return
  }
  func.func @transform_0(%arg0: i32) -> i32 {
    %c0_i32 = arith.constant 0 : i32
    %c0_i32_0 = arith.constant 0 : i32
    return %c0_i32 : i32
  }
  func.func @transform_1(%arg0: i32) -> (i32, i32) {
    %c0_i32 = arith.constant 0 : i32
    %c0_i32_0 = arith.constant 0 : i32
    return %arg0, %c0_i32 : i32, i32
  }
  func.func @transform_2(%arg0: i32) -> (i32, i32) {
    %c0_i32 = arith.constant 0 : i32
    %c0_i32_0 = arith.constant 0 : i32
    return %arg0, %c0_i32 : i32, i32
  }
}

</mosaic_0001>

<llo_original>
// kernel: tpu_custom_call.1
$region0: #{tpu_custom_call.1}
  #allocation0 [shape = 'u32[]', space=smem, size = 0x4, offset = 0x4, fixed_abs, tag = 'smem constant byte address 0x4 - core index']
  #allocation1 [shape = 'u32[144,128]{1,0:T(1,128)}', space=vmem, size = 0x12000, scoped, tag = 'internal scratch']
  #allocation2 [shape = 'f32[1]{0:T(128)S(6)}', space=smem, size = 0x200, scoped, tag = 'scoped memory for tpu_custom_call.1']
  %s0 = inlined_call_operand.<no memory space> [shape: f32[1], index: 0, kind: input, shape index: {}]
  %s1 = inlined_call_operand.hbm [shape: f32[1,2048], index: 1, kind: input, shape index: {}]
  %s2 = inlined_call_operand.hbm [shape: f32[1,2048], index: 2, kind: output, shape index: {}]
  %s3 = sld [smem:[#allocation0]]
  $region22: #{tpu_custom_call.1} parent=0
    _
  %s5 = ssub.s32 1, %s3
  %s6 = scalar_select 0, %s5, %s3
  %7 = sst [smem:[#allocation2]] %s0
  $region1: #{tpu_custom_call.1} parent=0
    #allocation3 [shape = 'u8[8192]{0}', space=vmem, size = 0x2000, scoped, tag = 'input window, operand 1, single buffered']
    #allocation4 [shape = 's32[1]{0}', space=sflag, size = 0x4, scoped, tag = 'scoped memory for tpu_custom_call.1']
    #allocation5 [shape = 's32[1]{0}', space=sflag, size = 0x4, scoped, tag = 'scoped memory for tpu_custom_call.1']
    #allocation6 [shape = 'u8[8192]{0}', space=vmem, size = 0x2000, scoped, tag = 'output window, operand 0, single buffered']
    %8 = vsyncpa [#allocation4], 0
    %9 = vsyncpa [#allocation5], 0
    // Predicated region
    $region2: #{tpu_custom_call.1} parent=1 // pred_check
      _
    $region3: #{tpu_custom_call.1} parent=1 // pred_check_branch
      %11 = sbr.rel (0) target = $region5
    $region4: #{tpu_custom_call.1} parent=1 // pred_region
      _
    $region5: #{tpu_custom_call.1} parent=1 // pred_fallthru
      _
    // Predicated region
    $region6: #{tpu_custom_call.1} parent=1 // pred_check
      _
    $region7: #{tpu_custom_call.1} parent=1 // pred_check_branch
      %13 = sbr.rel (0) target = $region9
    $region8: #{tpu_custom_call.1} parent=1 // pred_region
      %s15 = ssub.s32 256, 256
      %16 = vsyncadd [#allocation4], %s15
      %s18 = sshll.u32 [#allocation3], 4
      %s19 = int_to_ptr.vmem [resolvable:$true] %s18
      %21 = dma.hbm_to_vmem [thread:$0]  %s1, 256, %s19, [#allocation4]
    $region9: #{tpu_custom_call.1} parent=1 // pred_fallthru
      _
    // Predicated region
    $region10: #{tpu_custom_call.1} parent=1 // pred_check
      _
    $region11: #{tpu_custom_call.1} parent=1 // pred_check_branch
      %23 = sbr.rel (0) target = $region13
    $region12: #{tpu_custom_call.1} parent=1 // pred_region
      %24 = dma.done [#allocation4], 256
    $region13: #{tpu_custom_call.1} parent=1 // pred_fallthru
      _
    %v25 = vld [vmem:[#allocation3] sm:$0xff]
    %v26 = vld [vmem:[#allocation3 + $0x8] sm:$0xff]
    %s27 = sld [smem:[#allocation2]]
    %v28 = vstv %s27
    %v29 = vmul.f32 %v25, %v28
    %v30 = vmul.f32 %v26, %v28
    %31 = vst [vmem:[#allocation6] sm:$0xff] %v29
    %32 = vst [vmem:[#allocation6 + $0x8] sm:$0xff] %v30
    // Predicated region
    $region14: #{tpu_custom_call.1} parent=1 // pred_check
      _
    $region15: #{tpu_custom_call.1} parent=1 // pred_check_branch
      %34 = sbr.rel (0) target = $region17
    $region16: #{tpu_custom_call.1} parent=1 // pred_region
      %s36 = ssub.s32 256, 256
      %37 = vsyncadd [#allocation5], %s36
      %s39 = sshll.u32 [#allocation6], 4
      %s40 = int_to_ptr.vmem [resolvable:$true] %s39
      %42 = dma.vmem_to_hbm [thread:$0]  %s40, 256, %s2, [#allocation5]
    $region17: #{tpu_custom_call.1} parent=1 // pred_fallthru
      _
    // Predicated region
    $region18: #{tpu_custom_call.1} parent=1 // pred_check
      _
    $region19: #{tpu_custom_call.1} parent=1 // pred_check_branch
      %44 = sbr.rel (0) target = $region21
    $region20: #{tpu_custom_call.1} parent=1 // pred_region
      %45 = dma.done [#allocation5], 256
    $region21: #{tpu_custom_call.1} parent=1 // pred_fallthru
      _
    %46 = vsyncpa [#allocation4], 1
    %47 = vsyncpa [#allocation5], 1

</llo_original>
